<compile_context>
chip_gen: v7x
topology: tpu7x:2x2x1
jax: 0.10.0
libtpu: 0.0.40
codegen_flags: <defaults>
</compile_context>

<pallas_src>
import math
import jax
import jax.numpy as jnp
from jax.experimental import pallas as pl
from jax.experimental.pallas import tpu as pltpu


def _round_up(x, m):
    return ((x + m - 1) // m) * m


def _lstm_cell_kernel(x_ref, h_ref, cx_ref, wx_ref, wh_ref, b_ref, hy_ref, cy_ref):
    """One batch tile of the LSTM cell.

    x_ref  : (TB, I)     input tile
    h_ref  : (TB, H)     hidden-state tile
    cx_ref : (TB, H)     cell-state tile
    wx_ref : (I, 4H)     x2h weight, transposed, gate-order [i|f|o|g]
    wh_ref : (H, 4H)     h2h weight, transposed, gate-order [i|f|o|g]
    b_ref  : (1, 4H)     folded bias (bx + bh), f32
    hy_ref : (TB, H)     output hidden state
    cy_ref : (TB, H)     output cell state
    """
    H = cx_ref.shape[-1]

    # In-kernel cast to the weight compute dtype (e.g. bf16); no extra HBM op.
    wdt = wx_ref.dtype
    x = x_ref[...]
    h = h_ref[...]
    if x.dtype != wdt:
        x = x.astype(wdt)
    if h.dtype != wdt:
        h = h.astype(wdt)

    # Two MXU pushes, both accumulating in f32 (equivalent to one fused dot,
    # without the wrapper-side concat HBM pass).
    gates = (
        jnp.dot(x, wx_ref[...], preferred_element_type=jnp.float32)
        + jnp.dot(h, wh_ref[...], preferred_element_type=jnp.float32)
        + b_ref[...]
    )

    # Gate layout (reordered once in prepare_lstm_params): [i | f | o | g].
    if H % 128 == 0:
        # Lane-aligned slices: activate only the columns that need it.
        sig = jax.nn.sigmoid(gates[:, : 3 * H])
        g_g = jnp.tanh(gates[:, 3 * H:])
        i_g = sig[:, 0 * H:1 * H]
        f_g = sig[:, 1 * H:2 * H]
        o_g = sig[:, 2 * H:3 * H]
    else:
        # Toy H (< 128): sub-vreg slices are lane-misaligned, so full-slab
        # EUP ops + cheap VPU selects are the better tradeoff here.
        sig = jax.nn.sigmoid(gates)
        th = jnp.tanh(gates)
        i_g = sig[:, 0 * H:1 * H]
        f_g = sig[:, 1 * H:2 * H]
        o_g = sig[:, 2 * H:3 * H]
        g_g = th[:, 3 * H:4 * H]

    cx = cx_ref[...].astype(jnp.float32)
    cy = cx * f_g + i_g * g_g
    hy = o_g * jnp.tanh(cy)

    hy_ref[...] = hy.astype(hy_ref.dtype)
    cy_ref[...] = cy.astype(cy_ref.dtype)


def prepare_lstm_params(wx, bx, wh, bh, compute_dtype=None):
    """Fuse / permute PyTorch-layout params ONCE per layer (not per timestep).

    wx : (4H, I), bx : (4H,)  -- x2h Linear
    wh : (4H, H), bh : (4H,)  -- h2h Linear
    Gate order is permuted [i, f, g, o] -> [i, f, o, g] so the three sigmoid
    gates are contiguous (lane-aligned activation slices at H % 128 == 0).
    Returns wx_t (I, 4H), wh_t (H, 4H), b (1, 4H) f32.
    """
    H4 = wx.shape[0]

    def permute_gates(m):
        gi, gf, gg, go = jnp.split(m, 4, axis=0)
        return jnp.concatenate([gi, gf, go, gg], axis=0)

    wx_t = permute_gates(wx).T                                   # (I, 4H)
    wh_t = permute_gates(wh).T                                   # (H, 4H)
    b = permute_gates((bx + bh).reshape(4, -1)).reshape(1, H4).astype(jnp.float32)
    if compute_dtype is not None:
        # e.g. jnp.bfloat16 on v6e/v7x; gate math / cell state stay f32.
        wx_t = wx_t.astype(compute_dtype)
        wh_t = wh_t.astype(compute_dtype)
    return wx_t, wh_t, b


def lstm_cell(x, hx, cx, wx_t, wh_t, b, *, block_batch=256, vmem_limit_bytes=None):
    """Pallas LSTM cell forward.

    x : (B, I)   hx, cx : (B, H)
    wx_t (I, 4H), wh_t (H, 4H), b (1, 4H) from prepare_lstm_params().
    Returns (hy, cy), each (B, H).  For multi-timestep bf16 use, pass cx in
    f32 so cy (which keeps cx's dtype) does not drift.
    """
    B, I = x.shape
    H = cx.shape[1]
    assert wx_t.shape == (I, 4 * H)
    assert wh_t.shape == (H, 4 * H)
    assert b.shape == (1, 4 * H)

    # Batch tile: as large as possible (fills MXU sublanes, amortizes grid
    # overhead), but keep >= 2 grid steps when the batch allows it so the
    # "parallel" axis can shard across v7x's two TensorCores.
    B8 = _round_up(B, 8)
    TB = min(block_batch, B8)
    if B8 // TB < 2 and B8 >= 16:
        TB = _round_up(-(-B8 // 2), 8)
    Bp = _round_up(B8, TB)

    if Bp != B:
        pad = Bp - B
        x_in = jnp.pad(x, ((0, pad), (0, 0)))
        hx_in = jnp.pad(hx, ((0, pad), (0, 0)))
        cx_in = jnp.pad(cx, ((0, pad), (0, 0)))
    else:
        x_in, hx_in, cx_in = x, hx, cx

    grid = (Bp // TB,)

    hy, cy = pl.pallas_call(
        _lstm_cell_kernel,
        out_shape=(
            jax.ShapeDtypeStruct((Bp, H), hx.dtype),
            jax.ShapeDtypeStruct((Bp, H), cx.dtype),
        ),
        grid=grid,
        in_specs=[
            pl.BlockSpec((TB, I), lambda i: (i, 0)),   # x batch tile
            pl.BlockSpec((TB, H), lambda i: (i, 0)),   # hx batch tile
            pl.BlockSpec((TB, H), lambda i: (i, 0)),   # cx batch tile
            # Grid-invariant operands: resident in VMEM, single-buffered.
            pl.BlockSpec((I, 4 * H), lambda i: (0, 0), pipeline_mode=pl.Buffered(1)),
            pl.BlockSpec((H, 4 * H), lambda i: (0, 0), pipeline_mode=pl.Buffered(1)),
            pl.BlockSpec((1, 4 * H), lambda i: (0, 0), pipeline_mode=pl.Buffered(1)),
        ],
        out_specs=(
            pl.BlockSpec((TB, H), lambda i: (i, 0)),
            pl.BlockSpec((TB, H), lambda i: (i, 0)),
        ),
        compiler_params=pltpu.CompilerParams(
            dimension_semantics=("parallel",),          # megacore sharding
            vmem_limit_bytes=vmem_limit_bytes,          # raise for resident weights at big H
        ),
    )(x_in, hx_in, cx_in, wx_t, wh_t, b)

    if Bp != B:
        hy = hy[:B]
        cy = cy[:B]
    return hy, cy


def init_lstm_params(key, input_size, hidden_size, dtype=jnp.float32):
    """Deterministic init matching LSTMCell.reset_parameters (uniform(-std, std))."""
    std = 1.0 / math.sqrt(hidden_size)
    k1, k2, k3, k4 = jax.random.split(key, 4)
    wx = jax.random.uniform(k1, (4 * hidden_size, input_size), dtype, -std, std)
    bx = jax.random.uniform(k2, (4 * hidden_size,), dtype, -std, std)
    wh = jax.random.uniform(k3, (4 * hidden_size, hidden_size), dtype, -std, std)
    bh = jax.random.uniform(k4, (4 * hidden_size,), dtype, -std, std)
    return wx, bx, wh, bh


def _reference(x, hx, cx, wx, bx, wh, bh):
    gates = x @ wx.T + bx + hx @ wh.T + bh
    H = hx.shape[1]
    i = jax.nn.sigmoid(gates[:, 0 * H:1 * H])
    f = jax.nn.sigmoid(gates[:, 1 * H:2 * H])
    g = jnp.tanh(gates[:, 2 * H:3 * H])
    o = jax.nn.sigmoid(gates[:, 3 * H:4 * H])
    cy = cx * f + i * g
    hy = o * jnp.tanh(cy)
    return hy, cy


if __name__ == "__main__":
    batch = 2
    input_size = 16
    hidden_size = 32

    key = jax.random.PRNGKey(0)
    kx, kh, kc, kp = jax.random.split(key, 4)
    x = jax.random.normal(kx, (batch, input_size), jnp.float32)
    hx = jax.random.normal(kh, (batch, hidden_size), jnp.float32)
    cx = jax.random.normal(kc, (batch, hidden_size), jnp.float32)

    wx, bx, wh, bh = init_lstm_params(kp, input_size, hidden_size)

    # Transpose / permute / fold-bias ONCE per layer, not per timestep.
    wx_t, wh_t, b = prepare_lstm_params(wx, bx, wh, bh)

    hy, cy = lstm_cell(x, hx, cx, wx_t, wh_t, b)
    jax.block_until_ready((hy, cy))

    hy_ref, cy_ref = _reference(x, hx, cx, wx, bx, wh, bh)
    assert hy.shape == hy_ref.shape and cy.shape == cy_ref.shape
    assert jnp.allclose(hy, hy_ref, atol=1e-5, rtol=1e-5)
    assert jnp.allclose(cy, cy_ref, atol=1e-5, rtol=1e-5)

    print("KERNEL_OK")
</pallas_src>

<mosaic_0001>
module attributes {stable_mosaic.version = 11 : i64} {
  func.func @_lstm_cell_kernel(%arg0: i32, %arg1: memref<8x16xf32, #tpu.memory_space<vmem>>, %arg2: memref<8x32xf32, #tpu.memory_space<vmem>>, %arg3: memref<8x32xf32, #tpu.memory_space<vmem>>, %arg4: memref<16x128xf32, #tpu.memory_space<vmem>>, %arg5: memref<32x128xf32, #tpu.memory_space<vmem>>, %arg6: memref<1x128xf32, #tpu.memory_space<vmem>>, %arg7: memref<8x32xf32, #tpu.memory_space<vmem>>, %arg8: memref<8x32xf32, #tpu.memory_space<vmem>>) attributes {dimension_semantics = [#tpu.dimension_semantics<parallel>], iteration_bounds = array<i64: 1>, scalar_prefetch = 0 : i64, scratch_operands = 0 : i64, tpu.core_type = #tpu.core_type<tc>, window_params = [{transform_indices = @transform_0, window_bounds = array<i64: 8, 16>}, {transform_indices = @transform_1, window_bounds = array<i64: 8, 32>}, {transform_indices = @transform_2, window_bounds = array<i64: 8, 32>}, {pipeline_mode = #tpu.pipeline_mode<synchronous>, transform_indices = @transform_3, window_bounds = array<i64: 16, 128>}, {pipeline_mode = #tpu.pipeline_mode<synchronous>, transform_indices = @transform_4, window_bounds = array<i64: 32, 128>}, {pipeline_mode = #tpu.pipeline_mode<synchronous>, transform_indices = @transform_5, window_bounds = array<i64: 1, 128>}, {transform_indices = @transform_6, window_bounds = array<i64: 8, 32>}, {transform_indices = @transform_7, window_bounds = array<i64: 8, 32>}]} {
    %c0 = arith.constant 0 : index
    %c0_0 = arith.constant 0 : index
    %0 = vector.load %arg1[%c0, %c0_0] : memref<8x16xf32, #tpu.memory_space<vmem>>, vector<8x16xf32>
    %c0_1 = arith.constant 0 : index
    %c0_2 = arith.constant 0 : index
    %1 = vector.load %arg2[%c0_1, %c0_2] : memref<8x32xf32, #tpu.memory_space<vmem>>, vector<8x32xf32>
    %c0_3 = arith.constant 0 : index
    %c0_4 = arith.constant 0 : index
    %2 = vector.load %arg4[%c0_3, %c0_4] : memref<16x128xf32, #tpu.memory_space<vmem>>, vector<16x128xf32>
    %cst = arith.constant dense<0.000000e+00> : vector<8x128xf32>
    %3 = tpu.matmul %0, %2, %cst {dimension_numbers = #tpu.dot_dimension_numbers<[1], [0], [0], [1], [0, 0, 1, 1], [], []>} : vector<8x16xf32>, vector<16x128xf32>, vector<8x128xf32> -> vector<8x128xf32>
    %c0_5 = arith.constant 0 : index
    %c0_6 = arith.constant 0 : index
    %4 = vector.load %arg5[%c0_5, %c0_6] : memref<32x128xf32, #tpu.memory_space<vmem>>, vector<32x128xf32>
    %cst_7 = arith.constant dense<0.000000e+00> : vector<8x128xf32>
    %5 = tpu.matmul %1, %4, %cst_7 {dimension_numbers = #tpu.dot_dimension_numbers<[1], [0], [0], [1], [0, 0, 1, 1], [], []>} : vector<8x32xf32>, vector<32x128xf32>, vector<8x128xf32> -> vector<8x128xf32>
    %6 = arith.addf %3, %5 : vector<8x128xf32>
    %c0_8 = arith.constant 0 : index
    %c0_9 = arith.constant 0 : index
    %7 = vector.load %arg6[%c0_8, %c0_9] : memref<1x128xf32, #tpu.memory_space<vmem>>, vector<1x128xf32>
    %8 = vector.broadcast %7 : vector<1x128xf32> to vector<8x128xf32>
    %9 = arith.addf %6, %8 : vector<8x128xf32>
    %10 = arith.negf %9 : vector<8x128xf32>
    %11 = math.exp %10 : vector<8x128xf32>
    %cst_10 = arith.constant 1.000000e+00 : f32
    %12 = vector.broadcast %cst_10 : f32 to vector<8x128xf32>
    %13 = arith.addf %12, %11 : vector<8x128xf32>
    %14 = arith.divf %12, %13 : vector<8x128xf32>
    %15 = math.tanh %9 : vector<8x128xf32>
    %16 = vector.extract_strided_slice %14 {offsets = [0, 0], sizes = [8, 32], strides = [1, 1]} : vector<8x128xf32> to vector<8x32xf32>
    %17 = vector.extract_strided_slice %14 {offsets = [0, 32], sizes = [8, 32], strides = [1, 1]} : vector<8x128xf32> to vector<8x32xf32>
    %18 = vector.extract_strided_slice %14 {offsets = [0, 64], sizes = [8, 32], strides = [1, 1]} : vector<8x128xf32> to vector<8x32xf32>
    %19 = vector.extract_strided_slice %15 {offsets = [0, 96], sizes = [8, 32], strides = [1, 1]} : vector<8x128xf32> to vector<8x32xf32>
    %c0_11 = arith.constant 0 : index
    %c0_12 = arith.constant 0 : index
    %20 = vector.load %arg3[%c0_11, %c0_12] : memref<8x32xf32, #tpu.memory_space<vmem>>, vector<8x32xf32>
    %21 = arith.mulf %20, %17 : vector<8x32xf32>
    %22 = arith.mulf %16, %19 : vector<8x32xf32>
    %23 = arith.addf %21, %22 : vector<8x32xf32>
    %24 = math.tanh %23 : vector<8x32xf32>
    %25 = arith.mulf %18, %24 : vector<8x32xf32>
    %c0_13 = arith.constant 0 : index
    %c0_14 = arith.constant 0 : index
    %26 = vector.load %arg7[%c0_13, %c0_14] : memref<8x32xf32, #tpu.memory_space<vmem>>, vector<8x32xf32>
    tpu.vector_store %arg7[%c0_13, %c0_14], %25 {strides = array<i32>} : memref<8x32xf32, #tpu.memory_space<vmem>>, vector<8x32xf32>,
    %c0_15 = arith.constant 0 : index
    %c0_16 = arith.constant 0 : index
    %27 = vector.load %arg8[%c0_15, %c0_16] : memref<8x32xf32, #tpu.memory_space<vmem>>, vector<8x32xf32>
    tpu.vector_store %arg8[%c0_15, %c0_16], %23 {strides = array<i32>} : memref<8x32xf32, #tpu.memory_space<vmem>>, vector<8x32xf32>,
    return
  }
  func.func @transform_0(%arg0: i32) -> (i32, i32) {
    %c0_i32 = arith.constant 0 : i32
    %c0_i32_0 = arith.constant 0 : i32
    return %arg0, %c0_i32 : i32, i32
  }
  func.func @transform_1(%arg0: i32) -> (i32, i32) {
    %c0_i32 = arith.constant 0 : i32
    %c0_i32_0 = arith.constant 0 : i32
    return %arg0, %c0_i32 : i32, i32
  }
  func.func @transform_2(%arg0: i32) -> (i32, i32) {
    %c0_i32 = arith.constant 0 : i32
    %c0_i32_0 = arith.constant 0 : i32
    return %arg0, %c0_i32 : i32, i32
  }
  func.func @transform_3(%arg0: i32) -> (i32, i32) {
    %c0_i32 = arith.constant 0 : i32
    %c0_i32_0 = arith.constant 0 : i32
    %c0_i32_1 = arith.constant 0 : i32
    return %c0_i32, %c0_i32_0 : i32, i32
  }
  func.func @transform_4(%arg0: i32) -> (i32, i32) {
    %c0_i32 = arith.constant 0 : i32
    %c0_i32_0 = arith.constant 0 : i32
    %c0_i32_1 = arith.constant 0 : i32
    return %c0_i32, %c0_i32_0 : i32, i32
  }
  func.func @transform_5(%arg0: i32) -> (i32, i32) {
    %c0_i32 = arith.constant 0 : i32
    %c0_i32_0 = arith.constant 0 : i32
    %c0_i32_1 = arith.constant 0 : i32
    return %c0_i32, %c0_i32_0 : i32, i32
  }
  func.func @transform_6(%arg0: i32) -> (i32, i32) {
    %c0_i32 = arith.constant 0 : i32
    %c0_i32_0 = arith.constant 0 : i32
    return %arg0, %c0_i32 : i32, i32
  }
  func.func @transform_7(%arg0: i32) -> (i32, i32) {
    %c0_i32 = arith.constant 0 : i32
    %c0_i32_0 = arith.constant 0 : i32
    return %arg0, %c0_i32 : i32, i32
  }
}

</mosaic_0001>

<llo_original>
// kernel: tpu_custom_call.1
$region0: #{tpu_custom_call.1}
  #allocation0 [shape = 'u32[]', space=smem, size = 0x4, offset = 0x4, fixed_abs, tag = 'smem constant byte address 0x4 - core index']
  #allocation1 [shape = 'u32[144,128]{1,0:T(1,128)}', space=vmem, size = 0x12000, scoped, tag = 'internal scratch']
  %s0 = inlined_call_operand.hbm [shape: f32[8,16], index: 0, kind: input, shape index: {}]
  %s1 = inlined_call_operand.hbm [shape: f32[8,32], index: 1, kind: input, shape index: {}]
  %s2 = inlined_call_operand.hbm [shape: f32[8,32], index: 2, kind: input, shape index: {}]
  %s3 = inlined_call_operand.hbm [shape: f32[16,128], index: 3, kind: input, shape index: {}]
  %s4 = inlined_call_operand.hbm [shape: f32[32,128], index: 4, kind: input, shape index: {}]
  %s5 = inlined_call_operand.vmem [shape: f32[1,128], index: 5, kind: input, shape index: {}]
  %s6 = inlined_call_operand.hbm [shape: f32[8,32], index: 6, kind: output, shape index: {0}]
  %s7 = inlined_call_operand.hbm [shape: f32[8,32], index: 7, kind: output, shape index: {1}]
  %8 = xla_tuple %s6, %s7
  %s9 = sld [smem:[#allocation0]]
  $region62: #{tpu_custom_call.1} parent=0
    _
  %s11 = ssub.s32 1, %s9
  %s12 = scalar_select 0, %s11, %s9
  $region1: #{tpu_custom_call.1} parent=0
    #allocation2 [shape = 'u8[4096]{0}', space=vmem, size = 0x1000, scoped, tag = 'input window, operand 0, single buffered']
    #allocation3 [shape = 's32[1]{0}', space=sflag, size = 0x4, scoped, tag = 'scoped memory for tpu_custom_call.1']
    #allocation4 [shape = 's32[1]{0}', space=sflag, size = 0x4, scoped, tag = 'scoped memory for tpu_custom_call.1']
    #allocation5 [shape = 'u8[4096]{0}', space=vmem, size = 0x1000, scoped, tag = 'input window, operand 1, single buffered']
    #allocation6 [shape = 's32[1]{0}', space=sflag, size = 0x4, scoped, tag = 'scoped memory for tpu_custom_call.1']
    #allocation7 [shape = 'u8[4096]{0}', space=vmem, size = 0x1000, scoped, tag = 'input window, operand 2, single buffered']
    #allocation8 [shape = 'u8[8192]{0}', space=vmem, size = 0x2000, scoped, tag = 'input window, operand 3, single buffered']
    #allocation9 [shape = 's32[1]{0}', space=sflag, size = 0x4, scoped, tag = 'scoped memory for tpu_custom_call.1']
    #allocation10 [shape = 'u8[16384]{0}', space=vmem, size = 0x4000, scoped, tag = 'input window, operand 4, single buffered']
    #allocation11 [shape = 'u8[4096]{0}', space=vmem, size = 0x1000, scoped, tag = 'output window, operand 0, single buffered']
    #allocation12 [shape = 'u8[4096]{0}', space=vmem, size = 0x1000, scoped, tag = 'output window, operand 1, single buffered']
    #allocation13 [shape = 's32[1]{0}', space=sflag, size = 0x4, scoped, tag = 'scoped memory for tpu_custom_call.1']
    %13 = vsyncpa [#allocation3], 0
    %14 = vsyncpa [#allocation6], 0
    %15 = vsyncpa [#allocation9], 0
    %16 = vsyncpa [#allocation4], 0
    %17 = vsyncpa [#allocation13], 0
    // Predicated region
    $region2: #{tpu_custom_call.1} parent=1 // pred_check
      _
    $region3: #{tpu_custom_call.1} parent=1 // pred_check_branch
      %19 = sbr.rel (0) target = $region5
    $region4: #{tpu_custom_call.1} parent=1 // pred_region
      %s21 = ssub.s32 128, 128
      %22 = vsyncadd [#allocation3], %s21
      %s24 = sshll.u32 [#allocation2], 4
      %s25 = int_to_ptr.vmem [resolvable:$true] %s24
      %27 = dma.hbm_to_vmem [thread:$0]  %s0, 128, %s25, [#allocation3]
    $region5: #{tpu_custom_call.1} parent=1 // pred_fallthru
      _
    // Predicated region
    $region6: #{tpu_custom_call.1} parent=1 // pred_check
      _
    $region7: #{tpu_custom_call.1} parent=1 // pred_check_branch
      %29 = sbr.rel (0) target = $region9
    $region8: #{tpu_custom_call.1} parent=1 // pred_region
      %s31 = ssub.s32 128, 128
      %32 = vsyncadd [#allocation6], %s31
      %s34 = sshll.u32 [#allocation5], 4
      %s35 = int_to_ptr.vmem [resolvable:$true] %s34
      %37 = dma.hbm_to_vmem [thread:$0]  %s1, 128, %s35, [#allocation6]
    $region9: #{tpu_custom_call.1} parent=1 // pred_fallthru
      _
    // Predicated region
    $region10: #{tpu_custom_call.1} parent=1 // pred_check
      _
    $region11: #{tpu_custom_call.1} parent=1 // pred_check_branch
      %39 = sbr.rel (0) target = $region13
    $region12: #{tpu_custom_call.1} parent=1 // pred_region
      %s41 = ssub.s32 128, 128
      %42 = vsyncadd [#allocation6], %s41
      %s44 = sshll.u32 [#allocation7], 4
      %s45 = int_to_ptr.vmem [resolvable:$true] %s44
      %47 = dma.hbm_to_vmem [thread:$0]  %s2, 128, %s45, [#allocation6]
    $region13: #{tpu_custom_call.1} parent=1 // pred_fallthru
      _
    // Predicated region
    $region14: #{tpu_custom_call.1} parent=1 // pred_check
      _
    $region15: #{tpu_custom_call.1} parent=1 // pred_check_branch
      %49 = sbr.rel (0) target = $region17
    $region16: #{tpu_custom_call.1} parent=1 // pred_region
      %s51 = ssub.s32 256, 256
      %52 = vsyncadd [#allocation9], %s51
      %s53 = sshll.u32 [#allocation8], 4
      %s54 = int_to_ptr.vmem [resolvable:$true] %s53
      %59 = dma.hbm_to_vmem [thread:$0]  %s3, 256, %s54, [#allocation9], 128, 128, 8
    $region17: #{tpu_custom_call.1} parent=1 // pred_fallthru
      _
    // Predicated region
    $region18: #{tpu_custom_call.1} parent=1 // pred_check
      _
    $region19: #{tpu_custom_call.1} parent=1 // pred_check_branch
      %61 = sbr.rel (0) target = $region21
    $region20: #{tpu_custom_call.1} parent=1 // pred_region
      %s63 = ssub.s32 512, 512
      %64 = vsyncadd [#allocation9], %s63
      %s65 = sshll.u32 [#allocation10], 4
      %s66 = int_to_ptr.vmem [resolvable:$true] %s65
      %71 = dma.hbm_to_vmem [thread:$0]  %s4, 512, %s66, [#allocation9], 128, 128, 8
    $region21: #{tpu_custom_call.1} parent=1 // pred_fallthru
      _
    // Predicated region
    $region22: #{tpu_custom_call.1} parent=1 // pred_check
      _
    $region23: #{tpu_custom_call.1} parent=1 // pred_check_branch
      %73 = sbr.rel (0) target = $region25
    $region24: #{tpu_custom_call.1} parent=1 // pred_region
      _
    $region25: #{tpu_custom_call.1} parent=1 // pred_fallthru
      _
    // Predicated region
    $region26: #{tpu_custom_call.1} parent=1 // pred_check
      _
    $region27: #{tpu_custom_call.1} parent=1 // pred_check_branch
      %75 = sbr.rel (0) target = $region29
    $region28: #{tpu_custom_call.1} parent=1 // pred_region
      %76 = dma.done [#allocation3], 128
    $region29: #{tpu_custom_call.1} parent=1 // pred_fallthru
      _
    // Predicated region
    $region30: #{tpu_custom_call.1} parent=1 // pred_check
      _
    $region31: #{tpu_custom_call.1} parent=1 // pred_check_branch
      %78 = sbr.rel (0) target = $region33
    $region32: #{tpu_custom_call.1} parent=1 // pred_region
      %79 = dma.done [#allocation6], 128
    $region33: #{tpu_custom_call.1} parent=1 // pred_fallthru
      _
    // Predicated region
    $region34: #{tpu_custom_call.1} parent=1 // pred_check
      _
    $region35: #{tpu_custom_call.1} parent=1 // pred_check_branch
      %81 = sbr.rel (0) target = $region37
    $region36: #{tpu_custom_call.1} parent=1 // pred_region
      %82 = dma.done [#allocation6], 128
    $region37: #{tpu_custom_call.1} parent=1 // pred_fallthru
      _
    // Predicated region
    $region38: #{tpu_custom_call.1} parent=1 // pred_check
      _
    $region39: #{tpu_custom_call.1} parent=1 // pred_check_branch
      %84 = sbr.rel (0) target = $region41
    $region40: #{tpu_custom_call.1} parent=1 // pred_region
      %85 = dma.done [#allocation9], 256
    $region41: #{tpu_custom_call.1} parent=1 // pred_fallthru
      _
    // Predicated region
    $region42: #{tpu_custom_call.1} parent=1 // pred_check
      _
    $region43: #{tpu_custom_call.1} parent=1 // pred_check_branch
      %87 = sbr.rel (0) target = $region45
    $region44: #{tpu_custom_call.1} parent=1 // pred_region
      %88 = dma.done [#allocation9], 512
    $region45: #{tpu_custom_call.1} parent=1 // pred_fallthru
      _
    %v89 = vld [vmem:[#allocation2] sm:$0xff]
    %v90 = vld [vmem:[#allocation5] sm:$0xff]
    %v91 = vld [vmem:[#allocation8] sm:$0xff]
    %v92 = vld [vmem:[#allocation8 + $0x8] sm:$0xff]
    %v93 = vld [vmem:[#allocation10] sm:$0xff]
    %v94 = vld [vmem:[#allocation10 + $0x8] sm:$0xff]
    %v95 = vld [vmem:[#allocation10 + $0x10] sm:$0xff]
    %v96 = vld [vmem:[#allocation10 + $0x18] sm:$0xff]
    %vm97 = vcmask 261120
    %v99 = vsel %vm97, %v90, 0
    %101 = vmatprep.subr.mxu0 0.0
    %102 = vmatpush1.msra.mxu0 %v93
    %103 = vmatprep.subr.mxu0 0.0
    %104 = vmatpush1.msra.mxu0 %v94
    %105 = vmatprep.subr.mxu0 0.0
    %106 = vmatpush1.msra.mxu0 %v95
    %107 = vmatprep.subr.mxu0 0.0
    %108 = vmatpush1.msra.mxu0 %v96
    %109 = vmatprep.subr.mxu0 0.0
    %110 = vmatpush1.msra.mxu0 0.0
    %111 = vmatprep.subr.mxu0 0.0
    %112 = vmatpush1.msra.mxu0 0.0
    %113 = vmatprep.subr.mxu0 0.0
    %114 = vmatpush1.msra.mxu0 0.0
    %115 = vmatprep.subr.mxu0 0.0
    %116 = vmatpush1.msra.mxu0 0.0
    %117 = vmatprep.subr.mxu0 0.0
    %118 = vmatpush1.msra.mxu0 0.0
    %119 = vmatprep.subr.mxu0 0.0
    %120 = vmatpush1.msra.mxu0 0.0
    %121 = vmatprep.subr.mxu0 0.0
    %122 = vmatpush1.msra.mxu0 0.0
    %123 = vmatprep.subr.mxu0 0.0
    %124 = vmatpush1.msra.mxu0 0.0
    %125 = vmatprep.subr.mxu0 0.0
    %126 = vmatpush1.msra.mxu0 0.0
    %127 = vmatprep.subr.mxu0 0.0
    %128 = vmatpush1.msra.mxu0 0.0
    %129 = vmatprep.subr.mxu0 0.0
    %130 = vmatpush1.msra.mxu0 0.0
    %131 = vmatprep.subr.mxu0 0.0
    %132 = vmatpush1.msra.mxu0 0.0
    %133 = vmatprep.subr.mxu0 0.0
    %134 = vmatpush1.msra.mxu0 0.0
    %135 = vmatprep.subr.mxu0 0.0
    %136 = vmatpush1.msra.mxu0 0.0
    %137 = vmatprep.subr.mxu0 0.0
    %138 = vmatpush1.msra.mxu0 0.0
    %139 = vmatprep.subr.mxu0 0.0
    %140 = vmatpush1.msra.mxu0 0.0
    %141 = vmatprep.subr.mxu0 0.0
    %142 = vmatpush1.msra.mxu0 0.0
    %143 = vmatprep.subr.mxu0 0.0
    %144 = vmatpush1.msra.mxu0 0.0
    %145 = vmatprep.subr.mxu0 0.0
    %146 = vmatpush1.msra.mxu0 0.0
    %147 = vmatprep.subr.mxu0 0.0
    %148 = vmatpush1.msra.mxu0 0.0
    %149 = vmatprep.subr.mxu0 0.0
    %150 = vmatpush1.msra.mxu0 0.0
    %151 = vmatprep.subr.mxu0 0.0
    %152 = vmatpush1.msra.mxu0 0.0
    %153 = vmatprep.subr.mxu0 0.0
    %154 = vmatpush1.msra.mxu0 0.0
    %155 = vmatprep.subr.mxu0 0.0
    %156 = vmatpush1.msra.mxu0 0.0
    %157 = vmatprep.subr.mxu0 0.0
    %158 = vmatpush1.msra.mxu0 0.0
    %159 = vmatprep.subr.mxu0 0.0
    %160 = vmatpush1.msra.mxu0 0.0
    %161 = vmatprep.subr.mxu0 0.0
    %162 = vmatpush1.msra.mxu0 0.0
    %163 = vmatprep.subr.mxu0 0.0
    %164 = vmatpush1.msra.mxu0 0.0
    %165 = vmatprep.mubr.f32.mxu0 0.0
    %166 = vmatmul.mubr.f32.gmra.mrb[0].mxu0 %v99
    %v167 = vpop.f32.mrb[0].mxu0
    %v168 = vadd.f32 0.0, %v167
    %v169 = vpop.f32.mrb[0].mxu0
    %170 = vdwg.mxu0
    %vm171 = vcmask 130048
    %v173 = vsel %vm171, %v89, 0
    %175 = vmatprep.subr.mxu0 0.0
    %176 = vmatpush1.msra.mxu0 %v91
    %177 = vmatprep.subr.mxu0 0.0
    %178 = vmatpush1.msra.mxu0 %v92
    %179 = vmatprep.subr.mxu0 0.0
    %180 = vmatpush1.msra.mxu0 0.0
    %181 = vmatprep.subr.mxu0 0.0
    %182 = vmatpush1.msra.mxu0 0.0
    %183 = vmatprep.subr.mxu0 0.0
    %184 = vmatpush1.msra.mxu0 0.0
    %185 = vmatprep.subr.mxu0 0.0
    %186 = vmatpush1.msra.mxu0 0.0
    %187 = vmatprep.subr.mxu0 0.0
    %188 = vmatpush1.msra.mxu0 0.0
    %189 = vmatprep.subr.mxu0 0.0
    %190 = vmatpush1.msra.mxu0 0.0
    %191 = vmatprep.subr.mxu0 0.0
    %192 = vmatpush1.msra.mxu0 0.0
    %193 = vmatprep.subr.mxu0 0.0
    %194 = vmatpush1.msra.mxu0 0.0
    %195 = vmatprep.subr.mxu0 0.0
    %196 = vmatpush1.msra.mxu0 0.0
    %197 = vmatprep.subr.mxu0 0.0
    %198 = vmatpush1.msra.mxu0 0.0
    %199 = vmatprep.subr.mxu0 0.0
    %200 = vmatpush1.msra.mxu0 0.0
    %201 = vmatprep.subr.mxu0 0.0
    %202 = vmatpush1.msra.mxu0 0.0
    %203 = vmatprep.subr.mxu0 0.0
    %204 = vmatpush1.msra.mxu0 0.0
    %205 = vmatprep.subr.mxu0 0.0
    %206 = vmatpush1.msra.mxu0 0.0
    %207 = vmatprep.subr.mxu0 0.0
    %208 = vmatpush1.msra.mxu0 0.0
    %209 = vmatprep.subr.mxu0 0.0
    %210 = vmatpush1.msra.mxu0 0.0
    %211 = vmatprep.subr.mxu0 0.0
    %212 = vmatpush1.msra.mxu0 0.0
    %213 = vmatprep.subr.mxu0 0.0
    %214 = vmatpush1.msra.mxu0 0.0
    %215 = vmatprep.subr.mxu0 0.0
    %216 = vmatpush1.msra.mxu0 0.0
    %217 = vmatprep.subr.mxu0 0.0
    %218 = vmatpush1.msra.mxu0 0.0
    %219 = vmatprep.subr.mxu0 0.0
    %220 = vmatpush1.msra.mxu0 0.0
    %221 = vmatprep.subr.mxu0 0.0
    %222 = vmatpush1.msra.mxu0 0.0
    %223 = vmatprep.subr.mxu0 0.0
    %224 = vmatpush1.msra.mxu0 0.0
    %225 = vmatprep.subr.mxu0 0.0
    %226 = vmatpush1.msra.mxu0 0.0
    %227 = vmatprep.subr.mxu0 0.0
    %228 = vmatpush1.msra.mxu0 0.0
    %229 = vmatprep.subr.mxu0 0.0
    %230 = vmatpush1.msra.mxu0 0.0
    %231 = vmatprep.subr.mxu0 0.0
    %232 = vmatpush1.msra.mxu0 0.0
    %233 = vmatprep.subr.mxu0 0.0
    %234 = vmatpush1.msra.mxu0 0.0
    %235 = vmatprep.subr.mxu0 0.0
    %236 = vmatpush1.msra.mxu0 0.0
    %237 = vmatprep.subr.mxu0 0.0
    %238 = vmatpush1.msra.mxu0 0.0
    %239 = vmatprep.mubr.f32.mxu0 0.0
    %240 = vmatmul.mubr.f32.gmra.mrb[0].mxu0 %v173
    %v241 = vpop.f32.mrb[0].mxu0
    %v242 = vadd.f32 %v168, %v241
    %v243 = vpop.f32.mrb[0].mxu0
    %244 = vdwg.mxu0
    %v245 = vld [vmem:[%s5] sm:$0x1]
    %v247 = vlaneseq
    %v248 = vshrl.u32 %v247, 7
    %v249 = vsub.s32 0, %v248
    %v250 = vrot.slane %v245, %v249
    %v252 = vadd.f32 %v242, %v250
    %v253 = vxor.u32 %v252, 2147483648
    %v254 = vmul.f32 %v253, 1.442695
    %v255 = vpow.pop %v254
    %v256 = vadd.f32 %v255, 1.0
    %v257 = vrcp.pop %v256
    %v258 = vmul.f32 1.0, %v257
    %v259 = vtanh.pop %v252
    %v260 = vld [vmem:[#allocation7] sm:$0xff]
    %262 = vrot.lane.b32.xlu0 %v258, 96
    %v263 = vpop.permute.xlu0 %262
    %v265 = vmul.f32 %v260, %v263
    %267 = vrot.lane.b32.xlu0 %v259, 32
    %v268 = vpop.permute.xlu0 %267
    %v270 = vmul.f32 %v258, %v268
    %v271 = vadd.f32 %v265, %v270
    %v272 = vtanh.pop %v271
    %274 = vrot.lane.b32.xlu0 %v272, 64
    %v275 = vpop.permute.xlu0 %274
    %v277 = vmul.f32 %v258, %v275
    %279 = vrot.lane.b32.xlu0 %v277, 64
    %v280 = vpop.permute.xlu0 %279
    %282 = vst.msk [vmem:[#allocation11] sm:$0xff] %vm97, %v280
    %283 = vst.msk [vmem:[#allocation12] sm:$0xff] %vm97, %v271
    // Predicated region
    $region46: #{tpu_custom_call.1} parent=1 // pred_check
      _
    $region47: #{tpu_custom_call.1} parent=1 // pred_check_branch
      %285 = sbr.rel (0) target = $region49
    $region48: #{tpu_custom_call.1} parent=1 // pred_region
      %s287 = ssub.s32 128, 128
      %288 = vsyncadd [#allocation4], %s287
      %s290 = sshll.u32 [#allocation11], 4
      %s291 = int_to_ptr.vmem [resolvable:$true] %s290
      %293 = dma.vmem_to_hbm [thread:$0]  %s291, 128, %s6, [#allocation4]
    $region49: #{tpu_custom_call.1} parent=1 // pred_fallthru
      _
    // Predicated region
    $region50: #{tpu_custom_call.1} parent=1 // pred_check
      _
    $region51: #{tpu_custom_call.1} parent=1 // pred_check_branch
      %295 = sbr.rel (0) target = $region53
    $region52: #{tpu_custom_call.1} parent=1 // pred_region
      %s297 = ssub.s32 128, 128
      %298 = vsyncadd [#allocation13], %s297
      %s300 = sshll.u32 [#allocation12], 4
      %s301 = int_to_ptr.vmem [resolvable:$true] %s300
      %303 = dma.vmem_to_hbm [thread:$0]  %s301, 128, %s7, [#allocation13]
    $region53: #{tpu_custom_call.1} parent=1 // pred_fallthru
      _
    // Predicated region
    $region54: #{tpu_custom_call.1} parent=1 // pred_check
      _
    $region55: #{tpu_custom_call.1} parent=1 // pred_check_branch
      %305 = sbr.rel (0) target = $region57
    $region56: #{tpu_custom_call.1} parent=1 // pred_region
      %306 = dma.done [#allocation4], 128
    $region57: #{tpu_custom_call.1} parent=1 // pred_fallthru
      _
    // Predicated region
    $region58: #{tpu_custom_call.1} parent=1 // pred_check
      _
    $region59: #{tpu_custom_call.1} parent=1 // pred_check_branch
      %308 = sbr.rel (0) target = $region61
    $region60: #{tpu_custom_call.1} parent=1 // pred_region
      %309 = dma.done [#allocation13], 128
    $region61: #{tpu_custom_call.1} parent=1 // pred_fallthru
      _
    %310 = vsyncpa [#allocation3], 1
    %311 = vsyncpa [#allocation6], 1
    %312 = vsyncpa [#allocation9], 1
    %313 = vsyncpa [#allocation4], 1
    %314 = vsyncpa [#allocation13], 1

</llo_original>
